<compile_context>
chip_gen: v7x
topology: tpu7x:2x2x1
jax: 0.10.0
libtpu: 0.0.40
codegen_flags: <defaults>
</compile_context>

<pallas_src>
import math

import jax
import jax.numpy as jnp
from jax.experimental import pallas as pl
from jax.experimental.pallas import tpu as pltpu

_LANE = 128
_TARGET_BLOCK_BYTES = 4 * 1024 * 1024     # per data block (in or out), double-buffered
_VMEM_LIMIT_BYTES = 48 * 1024 * 1024      # explicit limit, safe on v5e/v6e/v7x
_MIN_PIPELINE_BYTES = 1 * 1024 * 1024     # below this, a single block is fine
_MIN_GRID_STEPS = 4                       # enough steps to pipeline / split across 2 TCs


def _sublane_pack(dtype) -> int:
    """Packed vreg height: 8 for f32, 16 for bf16, 32 for int8/fp8."""
    itemsize = jnp.dtype(dtype).itemsize
    return max(8, 32 // max(1, itemsize))


def _round_down(x: int, m: int) -> int:
    return (x // m) * m


def _fold_factor(rows: int, row_len: int) -> int:
    """Smallest g (dividing rows) so that g*row_len is a multiple of 128 lanes."""
    if row_len % _LANE == 0:
        return 1
    g = _LANE // math.gcd(row_len, _LANE)
    if g > 1 and rows % g == 0:
        return g
    return 1


# ----------------------------- kernel ---------------------------------------

def _add_bias_row_kernel(x_ref, b_ref, o_ref):
    # x_ref: (tm, lt) tile; b_ref: (1, lt) bias tile, broadcast over rows by the VPU.
    o_ref[...] = (x_ref[...] + b_ref[...]).astype(o_ref.dtype)


# ----------------------------- driver ---------------------------------------

def _add_rows(x2, bias_row, out_dtype):
    """x2: (R, K); bias_row: (K,) already in out_dtype.  Returns x2 + bias_row."""
    R, K = x2.shape
    itemsize = max(jnp.dtype(x2.dtype).itemsize, jnp.dtype(out_dtype).itemsize)
    pack = max(_sublane_pack(x2.dtype), _sublane_pack(out_dtype))

    b2 = bias_row.reshape(1, K)
    row_bytes = K * itemsize

    # --- lane tiling: only when even a pack-high stripe overflows the block budget.
    if pack * row_bytes > _TARGET_BLOCK_BYTES and K > _LANE:
        lt = _round_down(
            max(_TARGET_BLOCK_BYTES // (pack * itemsize), 4 * _LANE), _LANE)
        lt = max(_LANE, min(lt, _round_down(K, _LANE)))
        tm = pack if R > pack else R
    else:
        lt = K
        cand = max(pack, _round_down(_TARGET_BLOCK_BYTES // max(1, row_bytes), pack))
        tm = R if cand >= R else cand

    # --- guarantee enough grid steps on big arrays so pipelining / 2-TC sharding engage.
    total_bytes = R * K * itemsize
    if total_bytes >= _MIN_PIPELINE_BYTES and lt == K and R > pack:
        steps_cap = max(pack, _round_down(max(R // _MIN_GRID_STEPS, 1), pack))
        tm = min(tm, steps_cap)

    n_row = pl.cdiv(R, tm)
    n_lane = pl.cdiv(K, lt)
    # Lanes on the OUTER axis: the bias block index (0, j) is constant across the
    # inner row sweep, so the bias is DMA'd only once per lane block.
    grid = (n_lane, n_row)

    return pl.pallas_call(
        _add_bias_row_kernel,
        out_shape=jax.ShapeDtypeStruct((R, K), out_dtype),
        grid=grid,
        in_specs=[
            pl.BlockSpec((tm, lt), lambda j, i: (i, j)),
            pl.BlockSpec((1, lt), lambda j, i: (0, j)),
        ],
        out_specs=pl.BlockSpec((tm, lt), lambda j, i: (i, j)),
        compiler_params=pltpu.CompilerParams(
            dimension_semantics=("parallel", "parallel"),
            vmem_limit_bytes=_VMEM_LIMIT_BYTES,
        ),
    )(x2, b2)


# ----------------------------- wrapper ---------------------------------------

def add_bias(x, bias_param):
    """Pallas implementation of AddBias.forward.

    bias_param has shape (C, 1), matching nn.Parameter(bias.unsqueeze(1)).
    Output dtype follows PyTorch type promotion (e.g. bf16 x + f32 bias -> f32).
    """
    C = bias_param.shape[0]
    bias_vec = bias_param.reshape(C)
    out_dtype = jnp.result_type(x.dtype, bias_param.dtype)

    if x.ndim == 2:
        N, C2 = x.shape
        assert C2 == C, f"channel mismatch: {C2} vs {C}"
        x2 = x
        row = bias_vec                                   # (C,)
        R, K = N, C
    elif x.ndim == 4:
        N, C2, H, W = x.shape                            # layout: NCHW
        assert C2 == C, f"channel mismatch: {C2} vs {C}"
        L = H * W
        x2 = x.reshape(N, C * L)                         # free reshape (contiguous)
        row = jnp.repeat(bias_vec, L)                    # (C*L,), bias per flat position
        R, K = N, C * L
    else:
        raise ValueError(f"AddBias expects 2-D or 4-D input, got ndim={x.ndim}")

    # Fold rows into the lane dimension so stores are lane-dense (multiple of 128).
    g = _fold_factor(R, K)
    if g > 1:
        x2 = x2.reshape(R // g, g * K)
        row = jnp.tile(row, g)
        R, K = R // g, g * K

    out2 = _add_rows(x2, row.astype(out_dtype), out_dtype)

    if x.ndim == 2:
        return out2.reshape(x.shape)
    return out2.reshape(x.shape)


# ------------------------------- main ----------------------------------------

if __name__ == "__main__":
    key = jax.random.PRNGKey(0)
    k_bias, k_x4, k_x2 = jax.random.split(key, 3)

    N, C, H, W = 2, 4, 16, 16

    # Deterministic "parameter": bias of shape (C,), stored as (C, 1) like
    # nn.Parameter(bias.unsqueeze(1)).
    bias = jax.random.normal(k_bias, (C,), dtype=jnp.float32)
    bias_param = bias[:, None]                           # (C, 1)

    # 4-D (conv feature map, NCHW) path.
    x4 = jax.random.normal(k_x4, (N, C, H, W), dtype=jnp.float32)
    out4 = jax.block_until_ready(add_bias(x4, bias_param))
    ref4 = x4 + bias.reshape(1, C, 1, 1)
    assert out4.shape == x4.shape and out4.dtype == x4.dtype
    assert jnp.allclose(out4, ref4, atol=1e-6, rtol=1e-6)

    # 2-D (linear activation) path.
    x2 = jax.random.normal(k_x2, (N, C), dtype=jnp.float32)
    out2 = jax.block_until_ready(add_bias(x2, bias_param))
    ref2 = x2 + bias.reshape(1, C)
    assert out2.shape == x2.shape and out2.dtype == x2.dtype
    assert jnp.allclose(out2, ref2, atol=1e-6, rtol=1e-6)

    print("KERNEL_OK")
</pallas_src>

<mosaic_0001>
module attributes {stable_mosaic.version = 11 : i64} {
  func.func @_add_bias_row_kernel(%arg0: i32, %arg1: i32, %arg2: memref<2x1024xf32, #tpu.memory_space<vmem>>, %arg3: memref<1x1024xf32, #tpu.memory_space<vmem>>, %arg4: memref<2x1024xf32, #tpu.memory_space<vmem>>) attributes {dimension_semantics = [#tpu.dimension_semantics<parallel>, #tpu.dimension_semantics<parallel>], iteration_bounds = array<i64: 1, 1>, scalar_prefetch = 0 : i64, scratch_operands = 0 : i64, tpu.core_type = #tpu.core_type<tc>, window_params = [{transform_indices = @transform_0, window_bounds = array<i64: 2, 1024>}, {transform_indices = @transform_1, window_bounds = array<i64: 1, 1024>}, {transform_indices = @transform_2, window_bounds = array<i64: 2, 1024>}]} {
    %c0 = arith.constant 0 : index
    %c0_0 = arith.constant 0 : index
    %0 = vector.load %arg2[%c0, %c0_0] : memref<2x1024xf32, #tpu.memory_space<vmem>>, vector<2x1024xf32>
    %c0_1 = arith.constant 0 : index
    %c0_2 = arith.constant 0 : index
    %1 = vector.load %arg3[%c0_1, %c0_2] : memref<1x1024xf32, #tpu.memory_space<vmem>>, vector<1x1024xf32>
    %2 = vector.broadcast %1 : vector<1x1024xf32> to vector<2x1024xf32>
    %3 = arith.addf %0, %2 : vector<2x1024xf32>
    %c0_3 = arith.constant 0 : index
    %c0_4 = arith.constant 0 : index
    %4 = vector.load %arg4[%c0_3, %c0_4] : memref<2x1024xf32, #tpu.memory_space<vmem>>, vector<2x1024xf32>
    tpu.vector_store %arg4[%c0_3, %c0_4], %3 {strides = array<i32>} : memref<2x1024xf32, #tpu.memory_space<vmem>>, vector<2x1024xf32>,
    return
  }
  func.func @transform_0(%arg0: i32, %arg1: i32) -> (i32, i32) {
    %c0_i32 = arith.constant 0 : i32
    return %arg1, %arg0 : i32, i32
  }
  func.func @transform_1(%arg0: i32, %arg1: i32) -> (i32, i32) {
    %c0_i32 = arith.constant 0 : i32
    %c0_i32_0 = arith.constant 0 : i32
    return %c0_i32, %arg0 : i32, i32
  }
  func.func @transform_2(%arg0: i32, %arg1: i32) -> (i32, i32) {
    %c0_i32 = arith.constant 0 : i32
    return %arg1, %arg0 : i32, i32
  }
}

</mosaic_0001>

<llo_original>
// kernel: tpu_custom_call.1
$region0: #{tpu_custom_call.1}
  #allocation0 [shape = 'u32[]', space=smem, size = 0x4, offset = 0x4, fixed_abs, tag = 'smem constant byte address 0x4 - core index']
  #allocation1 [shape = 'u32[144,128]{1,0:T(1,128)}', space=vmem, size = 0x12000, scoped, tag = 'internal scratch']
  %s0 = inlined_call_operand.hbm [shape: f32[2,1024], index: 0, kind: input, shape index: {}]
  %s1 = inlined_call_operand.hbm [shape: f32[1,1024], index: 1, kind: input, shape index: {}]
  %s2 = inlined_call_operand.hbm [shape: f32[2,1024], index: 2, kind: output, shape index: {}]
  %s3 = sld [smem:[#allocation0]]
  $region26: #{tpu_custom_call.1} parent=0
    _
  %s5 = ssub.s32 1, %s3
  %s6 = scalar_select 0, %s5, %s3
  $region1: #{tpu_custom_call.1} parent=0
    #allocation2 [shape = 'u8[8192]{0}', space=vmem, size = 0x2000, scoped, tag = 'input window, operand 0, single buffered']
    #allocation3 [shape = 's32[1]{0}', space=sflag, size = 0x4, scoped, tag = 'scoped memory for tpu_custom_call.1']
    #allocation4 [shape = 's32[1]{0}', space=sflag, size = 0x4, scoped, tag = 'scoped memory for tpu_custom_call.1']
    #allocation5 [shape = 'u8[4096]{0}', space=vmem, size = 0x1000, scoped, tag = 'input window, operand 1, single buffered']
    #allocation6 [shape = 's32[1]{0}', space=sflag, size = 0x4, scoped, tag = 'scoped memory for tpu_custom_call.1']
    #allocation7 [shape = 'u8[8192]{0}', space=vmem, size = 0x2000, scoped, tag = 'output window, operand 0, single buffered']
    %7 = vsyncpa [#allocation3], 0
    %8 = vsyncpa [#allocation6], 0
    %9 = vsyncpa [#allocation4], 0
    // Predicated region
    $region2: #{tpu_custom_call.1} parent=1 // pred_check
      _
    $region3: #{tpu_custom_call.1} parent=1 // pred_check_branch
      %11 = sbr.rel (0) target = $region5
    $region4: #{tpu_custom_call.1} parent=1 // pred_region
      %s13 = ssub.s32 256, 256
      %14 = vsyncadd [#allocation3], %s13
      %s16 = sshll.u32 [#allocation2], 4
      %s17 = int_to_ptr.vmem [resolvable:$true] %s16
      %19 = dma.hbm_to_vmem [thread:$0]  %s0, 256, %s17, [#allocation3]
    $region5: #{tpu_custom_call.1} parent=1 // pred_fallthru
      _
    // Predicated region
    $region6: #{tpu_custom_call.1} parent=1 // pred_check
      _
    $region7: #{tpu_custom_call.1} parent=1 // pred_check_branch
      %21 = sbr.rel (0) target = $region9
    $region8: #{tpu_custom_call.1} parent=1 // pred_region
      %s23 = ssub.s32 128, 128
      %24 = vsyncadd [#allocation6], %s23
      %s26 = sshll.u32 [#allocation5], 4
      %s27 = int_to_ptr.vmem [resolvable:$true] %s26
      %29 = dma.hbm_to_vmem [thread:$0]  %s1, 128, %s27, [#allocation6]
    $region9: #{tpu_custom_call.1} parent=1 // pred_fallthru
      _
    // Predicated region
    $region10: #{tpu_custom_call.1} parent=1 // pred_check
      _
    $region11: #{tpu_custom_call.1} parent=1 // pred_check_branch
      %31 = sbr.rel (0) target = $region13
    $region12: #{tpu_custom_call.1} parent=1 // pred_region
      %32 = dma.done [#allocation3], 256
    $region13: #{tpu_custom_call.1} parent=1 // pred_fallthru
      _
    // Predicated region
    $region14: #{tpu_custom_call.1} parent=1 // pred_check
      _
    $region15: #{tpu_custom_call.1} parent=1 // pred_check_branch
      %34 = sbr.rel (0) target = $region17
    $region16: #{tpu_custom_call.1} parent=1 // pred_region
      %35 = dma.done [#allocation6], 128
    $region17: #{tpu_custom_call.1} parent=1 // pred_fallthru
      _
    %v36 = vld [vmem:[#allocation2] sm:$0xff]
    %v37 = vld [vmem:[#allocation2 + $0x8] sm:$0xff]
    %v38 = vld [vmem:[#allocation5] sm:$0xff]
    %v40 = vlaneseq
    %v41 = vshrl.u32 %v40, 7
    %v42 = vsub.s32 0, %v41
    %v43 = vrot.slane %v38, %v42
    %v44 = vlaneseq
    %v45 = vshrl.u32 %v44, 7
    %v46 = vsub.s32 1, %v45
    %v47 = vrot.slane %v38, %v46
    %v48 = vlaneseq
    %v49 = vshrl.u32 %v48, 7
    %v50 = vsub.s32 2, %v49
    %v51 = vrot.slane %v38, %v50
    %v52 = vlaneseq
    %v53 = vshrl.u32 %v52, 7
    %v54 = vsub.s32 3, %v53
    %v55 = vrot.slane %v38, %v54
    %v56 = vlaneseq
    %v57 = vshrl.u32 %v56, 7
    %v58 = vsub.s32 4, %v57
    %v59 = vrot.slane %v38, %v58
    %v60 = vlaneseq
    %v61 = vshrl.u32 %v60, 7
    %v62 = vsub.s32 5, %v61
    %v63 = vrot.slane %v38, %v62
    %v64 = vlaneseq
    %v65 = vshrl.u32 %v64, 7
    %v66 = vsub.s32 6, %v65
    %v67 = vrot.slane %v38, %v66
    %v68 = vlaneseq
    %v69 = vshrl.u32 %v68, 7
    %v70 = vsub.s32 7, %v69
    %v71 = vrot.slane %v38, %v70
    %v72 = vcombine.low %v43, %v47
    %v73 = vcombine.low %v51, %v55
    %v75 = vunpack.c.l.s4 1983009808
    %v76 = vunpack.c.0.s8 %v75
    %v77 = vlaneseq
    %v78 = vshrl.u32 %v77, 7
    %v79 = vsub.s32 %v76, %v78
    %v80 = vrot.slane %v72, %v79
    %v82 = vunpack.c.l.s4 1983009808
    %v83 = vunpack.c.0.s8 %v82
    %v84 = vlaneseq
    %v85 = vshrl.u32 %v84, 7
    %v86 = vsub.s32 %v83, %v85
    %v87 = vrot.slane %v73, %v86
    %v88 = vcombine.low %v80, %v87
    %v89 = vcombine.low %v59, %v63
    %v90 = vcombine.low %v67, %v71
    %v92 = vunpack.c.l.s4 1983009808
    %v93 = vunpack.c.0.s8 %v92
    %v94 = vlaneseq
    %v95 = vshrl.u32 %v94, 7
    %v96 = vsub.s32 %v93, %v95
    %v97 = vrot.slane %v89, %v96
    %v99 = vunpack.c.l.s4 1983009808
    %v100 = vunpack.c.0.s8 %v99
    %v101 = vlaneseq
    %v102 = vshrl.u32 %v101, 7
    %v103 = vsub.s32 %v100, %v102
    %v104 = vrot.slane %v90, %v103
    %v105 = vcombine.low %v97, %v104
    %v108 = vadd.f32 %v36, %v88
    %v109 = vadd.f32 %v37, %v105
    %110 = vst [vmem:[#allocation7] sm:$0xff] %v108
    %111 = vst [vmem:[#allocation7 + $0x8] sm:$0xff] %v109
    // Predicated region
    $region18: #{tpu_custom_call.1} parent=1 // pred_check
      _
    $region19: #{tpu_custom_call.1} parent=1 // pred_check_branch
      %113 = sbr.rel (0) target = $region21
    $region20: #{tpu_custom_call.1} parent=1 // pred_region
      %s115 = ssub.s32 256, 256
      %116 = vsyncadd [#allocation4], %s115
      %s118 = sshll.u32 [#allocation7], 4
      %s119 = int_to_ptr.vmem [resolvable:$true] %s118
      %121 = dma.vmem_to_hbm [thread:$0]  %s119, 256, %s2, [#allocation4]
    $region21: #{tpu_custom_call.1} parent=1 // pred_fallthru
      _
    // Predicated region
    $region22: #{tpu_custom_call.1} parent=1 // pred_check
      _
    $region23: #{tpu_custom_call.1} parent=1 // pred_check_branch
      %123 = sbr.rel (0) target = $region25
    $region24: #{tpu_custom_call.1} parent=1 // pred_region
      %124 = dma.done [#allocation4], 256
    $region25: #{tpu_custom_call.1} parent=1 // pred_fallthru
      _
    %125 = vsyncpa [#allocation3], 1
    %126 = vsyncpa [#allocation6], 1
    %127 = vsyncpa [#allocation4], 1

</llo_original>
